<compile_context>
chip_gen: v6e
topology: v6e:2x2x1
jax: 0.10.0
libtpu: 0.0.40
codegen_flags: <defaults>
</compile_context>

<pallas_src>
import jax
import jax.numpy as jnp
from jax import lax
from jax.experimental import pallas as pl
from jax.experimental.pallas import tpu as pltpu


def _ngram_kernel(idx_ref, slab_ref, out_ref):
    L = idx_ref.shape[0]
    V = slab_ref.shape[1] // 8

    # ---- Static weight views into the packed slab (single entry DMA, free slices). ----
    whh_f = slab_ref[V:2 * V, 0:4 * V]              # (V, 4V), g-cols pre-scaled x2
    fcw = slab_ref[2 * V:4 * V, 0:V]                # (2V, V)
    fcb = slab_ref[4 * V:4 * V + 1, 0:V]            # (1, V)

    # ---- Fused embedding+input-projection rows: one dynamic sublane load per position.
    # No dependence on the recurrence, so these overlap/hoist freely.
    rows = [slab_ref[pl.ds(idx_ref[t], 1), :] for t in range(L)]   # L x (1, 8V)
    xf = [r[:, 0:4 * V] for r in rows]              # forward gate pre-acts (x part + bias)
    gb = rows[L - 1][:, 4 * V:8 * V]                # reverse-direction gates, step 0

    # ---- Reverse direction (single step from zero state; computed first so it hides
    #      under the forward loop).  f gate and h0 @ W_hh_b vanish with zero state. ----
    sb = jax.nn.sigmoid(gb)                         # one EUP push covers all 4 gates
    g_b = 2.0 * sb[:, 3 * V:4 * V] - 1.0            # tanh via pre-doubled g pre-act
    h_bwd = sb[:, 2 * V:3 * V] * jnp.tanh(sb[:, 0:V] * g_b)     # o * tanh(i * g)

    # ---- Forward recurrence, fully unrolled, fused gates. ----
    # Step 0: zero initial state => no h @ W_hh matmul and no f*c term.
    s0 = jax.nn.sigmoid(xf[0])
    c = s0[:, 0:V] * (2.0 * s0[:, 3 * V:4 * V] - 1.0)            # i * g
    h = s0[:, 2 * V:3 * V] * jnp.tanh(c)                         # o * tanh(c)

    for t in range(1, L):                           # static L => full unroll
        gates = xf[t] + jnp.dot(h, whh_f, preferred_element_type=jnp.float32)
        s = jax.nn.sigmoid(gates)                   # ONE sigmoid for [i|f|o|g]
        i = s[:, 0:V]
        f = s[:, V:2 * V]
        o = s[:, 2 * V:3 * V]
        g = 2.0 * s[:, 3 * V:4 * V] - 1.0           # tanh(g_preact) on the VPU
        c = f * c + i * g
        h = o * jnp.tanh(c)

    # ---- Single fused FC matmul on the lane-concat of the two direction outputs. ----
    hcat = jnp.concatenate([h, h_bwd], axis=1)      # (1, 2V)
    out_ref[...] = jnp.dot(hcat, fcw, preferred_element_type=jnp.float32) + fcb


def ngram_net_forward(idx, packed):
    slab = packed["slab"]
    V = slab.shape[1] // 8
    # Clamp indices: VMEM refs have no runtime bounds check (OOB reads are silent).
    idx = jnp.clip(idx.astype(jnp.int32), 0, V - 1)
    return pl.pallas_call(
        _ngram_kernel,
        out_shape=jax.ShapeDtypeStruct((1, V), jnp.float32),
        in_specs=[pl.BlockSpec(memory_space=pltpu.MemorySpace.SMEM),
                  pl.BlockSpec(memory_space=pltpu.MemorySpace.VMEM)],
        out_specs=pl.BlockSpec(memory_space=pltpu.MemorySpace.VMEM),
    )(idx, slab)


# ----------------------------- parameter construction -----------------------------

def init_params(key, vocab_size):
    """Raw PyTorch-layout parameters: gate row blocks in [i|f|g|o] order."""
    V = vocab_size
    ks = jax.random.split(key, 11)
    s = 1.0 / jnp.sqrt(jnp.float32(V))
    u = lambda k, shape: jax.random.uniform(k, shape, jnp.float32, -s, s)
    return {
        "emb": jax.random.normal(ks[0], (V, V), jnp.float32),   # nn.Embedding(V, V)
        "wih_f": u(ks[1], (4 * V, V)), "whh_f": u(ks[2], (4 * V, V)),
        "bih_f": u(ks[3], (4 * V,)),   "bhh_f": u(ks[4], (4 * V,)),
        "wih_b": u(ks[5], (4 * V, V)), "whh_b": u(ks[6], (4 * V, V)),
        "bih_b": u(ks[7], (4 * V,)),   "bhh_b": u(ks[8], (4 * V,)),
        "fcw": u(ks[9], (V, 2 * V)),   "fcb": u(ks[10], (V,)),   # nn.Linear(2V, V)
    }


def _reorder_ifog(w, V):
    """Reorder first-axis gate blocks from PyTorch [i|f|g|o] to kernel [i|f|o|g]."""
    return jnp.concatenate([w[0:2 * V], w[3 * V:4 * V], w[2 * V:3 * V]], axis=0)


def pack_params(p):
    """Build the single kernel slab: fused proj table + W_hh_fwd^T + fc, g-cols doubled."""
    V = p["emb"].shape[1]
    wih_f_t = _reorder_ifog(p["wih_f"], V).T                        # (V, 4V)
    wih_b_t = _reorder_ifog(p["wih_b"], V).T                        # (V, 4V)
    b_f = _reorder_ifog(p["bih_f"] + p["bhh_f"], V).reshape(1, 4 * V)
    b_b = _reorder_ifog(p["bih_b"] + p["bhh_b"], V).reshape(1, 4 * V)

    def scale_g(m):  # pre-double the g-gate columns so tanh(z) == 2*sigmoid(2z) - 1
        return m.at[:, 3 * V:4 * V].multiply(2.0)

    proj_f = scale_g(p["emb"] @ wih_f_t + b_f)                      # (V, 4V)
    proj_b = scale_g(p["emb"] @ wih_b_t + b_b)                      # (V, 4V)
    proj_table = jnp.concatenate([proj_f, proj_b], axis=1)          # (V, 8V)

    whh_f = scale_g(_reorder_ifog(p["whh_f"], V).T)                 # (V, 4V)
    fcw = p["fcw"].T                                                # (2V, V)
    fcb = p["fcb"].reshape(1, V)                                    # (1, V)
    # W_hh_reverse is intentionally dropped: only the first reverse step (zero h0)
    # is ever needed for fc(lstm_out[-1:]).

    def pad_lanes(m):
        return jnp.pad(m, ((0, 0), (0, 8 * V - m.shape[1])))

    slab = jnp.concatenate(
        [proj_table, pad_lanes(whh_f), pad_lanes(fcw), pad_lanes(fcb)],
        axis=0).astype(jnp.float32)                                 # (4V+1, 8V)
    return {"slab": slab}


# ----------------------------------- reference -----------------------------------

def ngram_net_reference(idx, p):
    """Pure-JAX reference mirroring PyTorch semantics (full bidirectional LSTM)."""
    V = p["emb"].shape[1]
    x = p["emb"][idx]                                               # (L, V)

    def run_dir(xs, wih, whh, bih, bhh):
        wih_t, whh_t = wih.T, whh.T
        b = (bih + bhh).reshape(1, 4 * V)

        def step(carry, x_t):
            h, c = carry
            gates = x_t[None, :] @ wih_t + h @ whh_t + b
            i, f, g, o = jnp.split(gates, 4, axis=-1)               # PyTorch order
            i, f, o = jax.nn.sigmoid(i), jax.nn.sigmoid(f), jax.nn.sigmoid(o)
            g = jnp.tanh(g)
            c = f * c + i * g
            h = o * jnp.tanh(c)
            return (h, c), h[0]

        h0 = jnp.zeros((1, V), jnp.float32)
        _, hs = lax.scan(step, (h0, h0), xs)
        return hs                                                   # (L, V)

    hs_f = run_dir(x, p["wih_f"], p["whh_f"], p["bih_f"], p["bhh_f"])
    hs_b = run_dir(x[::-1], p["wih_b"], p["whh_b"], p["bih_b"], p["bhh_b"])[::-1]
    lstm_out = jnp.concatenate([hs_f, hs_b], axis=-1)               # (L, 2V)
    return lstm_out[-1:, :] @ p["fcw"].T + p["fcb"].reshape(1, V)


if __name__ == "__main__":
    VOCAB = 32
    SEQ = 8
    key = jax.random.PRNGKey(0)
    pkey, ikey = jax.random.split(key)

    raw = init_params(pkey, VOCAB)
    packed = pack_params(raw)
    idx = jax.random.randint(ikey, (SEQ,), 0, VOCAB, dtype=jnp.int32)

    out = jax.block_until_ready(ngram_net_forward(idx, packed))
    ref = ngram_net_reference(idx, raw)

    assert out.shape == (1, VOCAB), out.shape
    if not jnp.allclose(out, ref, atol=1e-4, rtol=1e-4):
        raise AssertionError("Pallas kernel does not match reference")
    print("KERNEL_OK")
</pallas_src>

<mosaic_0001>
module attributes {stable_mosaic.version = 11 : i64} {
  func.func @_ngram_kernel(%arg0: memref<8xi32, #tpu.memory_space<smem>>, %arg1: memref<129x256xf32, #tpu.memory_space<vmem>>, %arg2: memref<1x32xf32, #tpu.memory_space<vmem>>) attributes {dimension_semantics = [], scalar_prefetch = 0 : i64, scratch_operands = 0 : i64, tpu.core_type = #tpu.core_type<tc>} {
    %c32 = arith.constant 32 : index
    %c0 = arith.constant 0 : index
    %0 = vector.load %arg1[%c32, %c0] : memref<129x256xf32, #tpu.memory_space<vmem>>, vector<32x128xf32>
    %c64 = arith.constant 64 : index
    %c0_0 = arith.constant 0 : index
    %1 = vector.load %arg1[%c64, %c0_0] : memref<129x256xf32, #tpu.memory_space<vmem>>, vector<64x32xf32>
    %c128 = arith.constant 128 : index
    %c0_1 = arith.constant 0 : index
    %2 = vector.load %arg1[%c128, %c0_1] : memref<129x256xf32, #tpu.memory_space<vmem>>, vector<1x32xf32>
    %c0_2 = arith.constant 0 : index
    %3 = memref.load %arg0[%c0_2] : memref<8xi32, #tpu.memory_space<smem>>
    %4 = arith.index_cast %3 : i32 to index
    %c0_3 = arith.constant 0 : index
    %5 = vector.load %arg1[%4, %c0_3] : memref<129x256xf32, #tpu.memory_space<vmem>>, vector<1x256xf32>
    %c1 = arith.constant 1 : index
    %6 = memref.load %arg0[%c1] : memref<8xi32, #tpu.memory_space<smem>>
    %7 = arith.index_cast %6 : i32 to index
    %c0_4 = arith.constant 0 : index
    %8 = vector.load %arg1[%7, %c0_4] : memref<129x256xf32, #tpu.memory_space<vmem>>, vector<1x256xf32>
    %c2 = arith.constant 2 : index
    %9 = memref.load %arg0[%c2] : memref<8xi32, #tpu.memory_space<smem>>
    %10 = arith.index_cast %9 : i32 to index
    %c0_5 = arith.constant 0 : index
    %11 = vector.load %arg1[%10, %c0_5] : memref<129x256xf32, #tpu.memory_space<vmem>>, vector<1x256xf32>
    %c3 = arith.constant 3 : index
    %12 = memref.load %arg0[%c3] : memref<8xi32, #tpu.memory_space<smem>>
    %13 = arith.index_cast %12 : i32 to index
    %c0_6 = arith.constant 0 : index
    %14 = vector.load %arg1[%13, %c0_6] : memref<129x256xf32, #tpu.memory_space<vmem>>, vector<1x256xf32>
    %c4 = arith.constant 4 : index
    %15 = memref.load %arg0[%c4] : memref<8xi32, #tpu.memory_space<smem>>
    %16 = arith.index_cast %15 : i32 to index
    %c0_7 = arith.constant 0 : index
    %17 = vector.load %arg1[%16, %c0_7] : memref<129x256xf32, #tpu.memory_space<vmem>>, vector<1x256xf32>
    %c5 = arith.constant 5 : index
    %18 = memref.load %arg0[%c5] : memref<8xi32, #tpu.memory_space<smem>>
    %19 = arith.index_cast %18 : i32 to index
    %c0_8 = arith.constant 0 : index
    %20 = vector.load %arg1[%19, %c0_8] : memref<129x256xf32, #tpu.memory_space<vmem>>, vector<1x256xf32>
    %c6 = arith.constant 6 : index
    %21 = memref.load %arg0[%c6] : memref<8xi32, #tpu.memory_space<smem>>
    %22 = arith.index_cast %21 : i32 to index
    %c0_9 = arith.constant 0 : index
    %23 = vector.load %arg1[%22, %c0_9] : memref<129x256xf32, #tpu.memory_space<vmem>>, vector<1x256xf32>
    %c7 = arith.constant 7 : index
    %24 = memref.load %arg0[%c7] : memref<8xi32, #tpu.memory_space<smem>>
    %25 = arith.index_cast %24 : i32 to index
    %c0_10 = arith.constant 0 : index
    %26 = vector.load %arg1[%25, %c0_10] : memref<129x256xf32, #tpu.memory_space<vmem>>, vector<1x256xf32>
    %27 = vector.extract_strided_slice %5 {offsets = [0, 0], sizes = [1, 128], strides = [1, 1]} : vector<1x256xf32> to vector<1x128xf32>
    %28 = vector.extract_strided_slice %8 {offsets = [0, 0], sizes = [1, 128], strides = [1, 1]} : vector<1x256xf32> to vector<1x128xf32>
    %29 = vector.extract_strided_slice %11 {offsets = [0, 0], sizes = [1, 128], strides = [1, 1]} : vector<1x256xf32> to vector<1x128xf32>
    %30 = vector.extract_strided_slice %14 {offsets = [0, 0], sizes = [1, 128], strides = [1, 1]} : vector<1x256xf32> to vector<1x128xf32>
    %31 = vector.extract_strided_slice %17 {offsets = [0, 0], sizes = [1, 128], strides = [1, 1]} : vector<1x256xf32> to vector<1x128xf32>
    %32 = vector.extract_strided_slice %20 {offsets = [0, 0], sizes = [1, 128], strides = [1, 1]} : vector<1x256xf32> to vector<1x128xf32>
    %33 = vector.extract_strided_slice %23 {offsets = [0, 0], sizes = [1, 128], strides = [1, 1]} : vector<1x256xf32> to vector<1x128xf32>
    %34 = vector.extract_strided_slice %26 {offsets = [0, 0], sizes = [1, 128], strides = [1, 1]} : vector<1x256xf32> to vector<1x128xf32>
    %35 = vector.extract_strided_slice %26 {offsets = [0, 128], sizes = [1, 128], strides = [1, 1]} : vector<1x256xf32> to vector<1x128xf32>
    %36 = arith.negf %35 : vector<1x128xf32>
    %37 = math.exp %36 : vector<1x128xf32>
    %cst = arith.constant 1.000000e+00 : f32
    %38 = vector.broadcast %cst : f32 to vector<1x128xf32>
    %39 = arith.addf %38, %37 : vector<1x128xf32>
    %40 = arith.divf %38, %39 : vector<1x128xf32>
    %41 = vector.extract_strided_slice %40 {offsets = [0, 96], sizes = [1, 32], strides = [1, 1]} : vector<1x128xf32> to vector<1x32xf32>
    %cst_11 = arith.constant 2.000000e+00 : f32
    %42 = vector.broadcast %cst_11 : f32 to vector<1x32xf32>
    %43 = arith.mulf %42, %41 : vector<1x32xf32>
    %cst_12 = arith.constant 1.000000e+00 : f32
    %44 = vector.broadcast %cst_12 : f32 to vector<1x32xf32>
    %45 = arith.subf %43, %44 : vector<1x32xf32>
    %46 = vector.extract_strided_slice %40 {offsets = [0, 64], sizes = [1, 32], strides = [1, 1]} : vector<1x128xf32> to vector<1x32xf32>
    %47 = vector.extract_strided_slice %40 {offsets = [0, 0], sizes = [1, 32], strides = [1, 1]} : vector<1x128xf32> to vector<1x32xf32>
    %48 = arith.mulf %47, %45 : vector<1x32xf32>
    %49 = math.tanh %48 : vector<1x32xf32>
    %50 = arith.mulf %46, %49 : vector<1x32xf32>
    %51 = arith.negf %27 : vector<1x128xf32>
    %52 = math.exp %51 : vector<1x128xf32>
    %cst_13 = arith.constant 1.000000e+00 : f32
    %53 = vector.broadcast %cst_13 : f32 to vector<1x128xf32>
    %54 = arith.addf %53, %52 : vector<1x128xf32>
    %55 = arith.divf %53, %54 : vector<1x128xf32>
    %56 = vector.extract_strided_slice %55 {offsets = [0, 0], sizes = [1, 32], strides = [1, 1]} : vector<1x128xf32> to vector<1x32xf32>
    %57 = vector.extract_strided_slice %55 {offsets = [0, 96], sizes = [1, 32], strides = [1, 1]} : vector<1x128xf32> to vector<1x32xf32>
    %cst_14 = arith.constant 2.000000e+00 : f32
    %58 = vector.broadcast %cst_14 : f32 to vector<1x32xf32>
    %59 = arith.mulf %58, %57 : vector<1x32xf32>
    %cst_15 = arith.constant 1.000000e+00 : f32
    %60 = vector.broadcast %cst_15 : f32 to vector<1x32xf32>
    %61 = arith.subf %59, %60 : vector<1x32xf32>
    %62 = arith.mulf %56, %61 : vector<1x32xf32>
    %63 = vector.extract_strided_slice %55 {offsets = [0, 64], sizes = [1, 32], strides = [1, 1]} : vector<1x128xf32> to vector<1x32xf32>
    %64 = math.tanh %62 : vector<1x32xf32>
    %65 = arith.mulf %63, %64 : vector<1x32xf32>
    %cst_16 = arith.constant dense<0.000000e+00> : vector<1x128xf32>
    %66 = tpu.matmul %65, %0, %cst_16 {dimension_numbers = #tpu.dot_dimension_numbers<[1], [0], [0], [1], [0, 0, 1, 1], [], []>} : vector<1x32xf32>, vector<32x128xf32>, vector<1x128xf32> -> vector<1x128xf32>
    %67 = arith.addf %28, %66 : vector<1x128xf32>
    %68 = arith.negf %67 : vector<1x128xf32>
    %69 = math.exp %68 : vector<1x128xf32>
    %cst_17 = arith.constant 1.000000e+00 : f32
    %70 = vector.broadcast %cst_17 : f32 to vector<1x128xf32>
    %71 = arith.addf %70, %69 : vector<1x128xf32>
    %72 = arith.divf %70, %71 : vector<1x128xf32>
    %73 = vector.extract_strided_slice %72 {offsets = [0, 0], sizes = [1, 32], strides = [1, 1]} : vector<1x128xf32> to vector<1x32xf32>
    %74 = vector.extract_strided_slice %72 {offsets = [0, 32], sizes = [1, 32], strides = [1, 1]} : vector<1x128xf32> to vector<1x32xf32>
    %75 = vector.extract_strided_slice %72 {offsets = [0, 64], sizes = [1, 32], strides = [1, 1]} : vector<1x128xf32> to vector<1x32xf32>
    %76 = vector.extract_strided_slice %72 {offsets = [0, 96], sizes = [1, 32], strides = [1, 1]} : vector<1x128xf32> to vector<1x32xf32>
    %cst_18 = arith.constant 2.000000e+00 : f32
    %77 = vector.broadcast %cst_18 : f32 to vector<1x32xf32>
    %78 = arith.mulf %77, %76 : vector<1x32xf32>
    %cst_19 = arith.constant 1.000000e+00 : f32
    %79 = vector.broadcast %cst_19 : f32 to vector<1x32xf32>
    %80 = arith.subf %78, %79 : vector<1x32xf32>
    %81 = arith.mulf %74, %62 : vector<1x32xf32>
    %82 = arith.mulf %73, %80 : vector<1x32xf32>
    %83 = arith.addf %81, %82 : vector<1x32xf32>
    %84 = math.tanh %83 : vector<1x32xf32>
    %85 = arith.mulf %75, %84 : vector<1x32xf32>
    %cst_20 = arith.constant dense<0.000000e+00> : vector<1x128xf32>
    %86 = tpu.matmul %85, %0, %cst_20 {dimension_numbers = #tpu.dot_dimension_numbers<[1], [0], [0], [1], [0, 0, 1, 1], [], []>} : vector<1x32xf32>, vector<32x128xf32>, vector<1x128xf32> -> vector<1x128xf32>
    %87 = arith.addf %29, %86 : vector<1x128xf32>
    %88 = arith.negf %87 : vector<1x128xf32>
    %89 = math.exp %88 : vector<1x128xf32>
    %cst_21 = arith.constant 1.000000e+00 : f32
    %90 = vector.broadcast %cst_21 : f32 to vector<1x128xf32>
    %91 = arith.addf %90, %89 : vector<1x128xf32>
    %92 = arith.divf %90, %91 : vector<1x128xf32>
    %93 = vector.extract_strided_slice %92 {offsets = [0, 0], sizes = [1, 32], strides = [1, 1]} : vector<1x128xf32> to vector<1x32xf32>
    %94 = vector.extract_strided_slice %92 {offsets = [0, 32], sizes = [1, 32], strides = [1, 1]} : vector<1x128xf32> to vector<1x32xf32>
    %95 = vector.extract_strided_slice %92 {offsets = [0, 64], sizes = [1, 32], strides = [1, 1]} : vector<1x128xf32> to vector<1x32xf32>
    %96 = vector.extract_strided_slice %92 {offsets = [0, 96], sizes = [1, 32], strides = [1, 1]} : vector<1x128xf32> to vector<1x32xf32>
    %cst_22 = arith.constant 2.000000e+00 : f32
    %97 = vector.broadcast %cst_22 : f32 to vector<1x32xf32>
    %98 = arith.mulf %97, %96 : vector<1x32xf32>
    %cst_23 = arith.constant 1.000000e+00 : f32
    %99 = vector.broadcast %cst_23 : f32 to vector<1x32xf32>
    %100 = arith.subf %98, %99 : vector<1x32xf32>
    %101 = arith.mulf %94, %83 : vector<1x32xf32>
    %102 = arith.mulf %93, %100 : vector<1x32xf32>
    %103 = arith.addf %101, %102 : vector<1x32xf32>
    %104 = math.tanh %103 : vector<1x32xf32>
    %105 = arith.mulf %95, %104 : vector<1x32xf32>
    %cst_24 = arith.constant dense<0.000000e+00> : vector<1x128xf32>
    %106 = tpu.matmul %105, %0, %cst_24 {dimension_numbers = #tpu.dot_dimension_numbers<[1], [0], [0], [1], [0, 0, 1, 1], [], []>} : vector<1x32xf32>, vector<32x128xf32>, vector<1x128xf32> -> vector<1x128xf32>
    %107 = arith.addf %30, %106 : vector<1x128xf32>
    %108 = arith.negf %107 : vector<1x128xf32>
    %109 = math.exp %108 : vector<1x128xf32>
    %cst_25 = arith.constant 1.000000e+00 : f32
    %110 = vector.broadcast %cst_25 : f32 to vector<1x128xf32>
    %111 = arith.addf %110, %109 : vector<1x128xf32>
    %112 = arith.divf %110, %111 : vector<1x128xf32>
    %113 = vector.extract_strided_slice %112 {offsets = [0, 0], sizes = [1, 32], strides = [1, 1]} : vector<1x128xf32> to vector<1x32xf32>
    %114 = vector.extract_strided_slice %112 {offsets = [0, 32], sizes = [1, 32], strides = [1, 1]} : vector<1x128xf32> to vector<1x32xf32>
    %115 = vector.extract_strided_slice %112 {offsets = [0, 64], sizes = [1, 32], strides = [1, 1]} : vector<1x128xf32> to vector<1x32xf32>
    %116 = vector.extract_strided_slice %112 {offsets = [0, 96], sizes = [1, 32], strides = [1, 1]} : vector<1x128xf32> to vector<1x32xf32>
    %cst_26 = arith.constant 2.000000e+00 : f32
    %117 = vector.broadcast %cst_26 : f32 to vector<1x32xf32>
    %118 = arith.mulf %117, %116 : vector<1x32xf32>
    %cst_27 = arith.constant 1.000000e+00 : f32
    %119 = vector.broadcast %cst_27 : f32 to vector<1x32xf32>
    %120 = arith.subf %118, %119 : vector<1x32xf32>
    %121 = arith.mulf %114, %103 : vector<1x32xf32>
    %122 = arith.mulf %113, %120 : vector<1x32xf32>
    %123 = arith.addf %121, %122 : vector<1x32xf32>
    %124 = math.tanh %123 : vector<1x32xf32>
    %125 = arith.mulf %115, %124 : vector<1x32xf32>
    %cst_28 = arith.constant dense<0.000000e+00> : vector<1x128xf32>
    %126 = tpu.matmul %125, %0, %cst_28 {dimension_numbers = #tpu.dot_dimension_numbers<[1], [0], [0], [1], [0, 0, 1, 1], [], []>} : vector<1x32xf32>, vector<32x128xf32>, vector<1x128xf32> -> vector<1x128xf32>
    %127 = arith.addf %31, %126 : vector<1x128xf32>
    %128 = arith.negf %127 : vector<1x128xf32>
    %129 = math.exp %128 : vector<1x128xf32>
    %cst_29 = arith.constant 1.000000e+00 : f32
    %130 = vector.broadcast %cst_29 : f32 to vector<1x128xf32>
    %131 = arith.addf %130, %129 : vector<1x128xf32>
    %132 = arith.divf %130, %131 : vector<1x128xf32>
    %133 = vector.extract_strided_slice %132 {offsets = [0, 0], sizes = [1, 32], strides = [1, 1]} : vector<1x128xf32> to vector<1x32xf32>
    %134 = vector.extract_strided_slice %132 {offsets = [0, 32], sizes = [1, 32], strides = [1, 1]} : vector<1x128xf32> to vector<1x32xf32>
    %135 = vector.extract_strided_slice %132 {offsets = [0, 64], sizes = [1, 32], strides = [1, 1]} : vector<1x128xf32> to vector<1x32xf32>
    %136 = vector.extract_strided_slice %132 {offsets = [0, 96], sizes = [1, 32], strides = [1, 1]} : vector<1x128xf32> to vector<1x32xf32>
    %cst_30 = arith.constant 2.000000e+00 : f32
    %137 = vector.broadcast %cst_30 : f32 to vector<1x32xf32>
    %138 = arith.mulf %137, %136 : vector<1x32xf32>
    %cst_31 = arith.constant 1.000000e+00 : f32
    %139 = vector.broadcast %cst_31 : f32 to vector<1x32xf32>
    %140 = arith.subf %138, %139 : vector<1x32xf32>
    %141 = arith.mulf %134, %123 : vector<1x32xf32>
    %142 = arith.mulf %133, %140 : vector<1x32xf32>
    %143 = arith.addf %141, %142 : vector<1x32xf32>
    %144 = math.tanh %143 : vector<1x32xf32>
    %145 = arith.mulf %135, %144 : vector<1x32xf32>
    %cst_32 = arith.constant dense<0.000000e+00> : vector<1x128xf32>
    %146 = tpu.matmul %145, %0, %cst_32 {dimension_numbers = #tpu.dot_dimension_numbers<[1], [0], [0], [1], [0, 0, 1, 1], [], []>} : vector<1x32xf32>, vector<32x128xf32>, vector<1x128xf32> -> vector<1x128xf32>
    %147 = arith.addf %32, %146 : vector<1x128xf32>
    %148 = arith.negf %147 : vector<1x128xf32>
    %149 = math.exp %148 : vector<1x128xf32>
    %cst_33 = arith.constant 1.000000e+00 : f32
    %150 = vector.broadcast %cst_33 : f32 to vector<1x128xf32>
    %151 = arith.addf %150, %149 : vector<1x128xf32>
    %152 = arith.divf %150, %151 : vector<1x128xf32>
    %153 = vector.extract_strided_slice %152 {offsets = [0, 0], sizes = [1, 32], strides = [1, 1]} : vector<1x128xf32> to vector<1x32xf32>
    %154 = vector.extract_strided_slice %152 {offsets = [0, 32], sizes = [1, 32], strides = [1, 1]} : vector<1x128xf32> to vector<1x32xf32>
    %155 = vector.extract_strided_slice %152 {offsets = [0, 64], sizes = [1, 32], strides = [1, 1]} : vector<1x128xf32> to vector<1x32xf32>
    %156 = vector.extract_strided_slice %152 {offsets = [0, 96], sizes = [1, 32], strides = [1, 1]} : vector<1x128xf32> to vector<1x32xf32>
    %cst_34 = arith.constant 2.000000e+00 : f32
    %157 = vector.broadcast %cst_34 : f32 to vector<1x32xf32>
    %158 = arith.mulf %157, %156 : vector<1x32xf32>
    %cst_35 = arith.constant 1.000000e+00 : f32
    %159 = vector.broadcast %cst_35 : f32 to vector<1x32xf32>
    %160 = arith.subf %158, %159 : vector<1x32xf32>
    %161 = arith.mulf %154, %143 : vector<1x32xf32>
    %162 = arith.mulf %153, %160 : vector<1x32xf32>
    %163 = arith.addf %161, %162 : vector<1x32xf32>
    %164 = math.tanh %163 : vector<1x32xf32>
    %165 = arith.mulf %155, %164 : vector<1x32xf32>
    %cst_36 = arith.constant dense<0.000000e+00> : vector<1x128xf32>
    %166 = tpu.matmul %165, %0, %cst_36 {dimension_numbers = #tpu.dot_dimension_numbers<[1], [0], [0], [1], [0, 0, 1, 1], [], []>} : vector<1x32xf32>, vector<32x128xf32>, vector<1x128xf32> -> vector<1x128xf32>
    %167 = arith.addf %33, %166 : vector<1x128xf32>
    %168 = arith.negf %167 : vector<1x128xf32>
    %169 = math.exp %168 : vector<1x128xf32>
    %cst_37 = arith.constant 1.000000e+00 : f32
    %170 = vector.broadcast %cst_37 : f32 to vector<1x128xf32>
    %171 = arith.addf %170, %169 : vector<1x128xf32>
    %172 = arith.divf %170, %171 : vector<1x128xf32>
    %173 = vector.extract_strided_slice %172 {offsets = [0, 0], sizes = [1, 32], strides = [1, 1]} : vector<1x128xf32> to vector<1x32xf32>
    %174 = vector.extract_strided_slice %172 {offsets = [0, 32], sizes = [1, 32], strides = [1, 1]} : vector<1x128xf32> to vector<1x32xf32>
    %175 = vector.extract_strided_slice %172 {offsets = [0, 64], sizes = [1, 32], strides = [1, 1]} : vector<1x128xf32> to vector<1x32xf32>
    %176 = vector.extract_strided_slice %172 {offsets = [0, 96], sizes = [1, 32], strides = [1, 1]} : vector<1x128xf32> to vector<1x32xf32>
    %cst_38 = arith.constant 2.000000e+00 : f32
    %177 = vector.broadcast %cst_38 : f32 to vector<1x32xf32>
    %178 = arith.mulf %177, %176 : vector<1x32xf32>
    %cst_39 = arith.constant 1.000000e+00 : f32
    %179 = vector.broadcast %cst_39 : f32 to vector<1x32xf32>
    %180 = arith.subf %178, %179 : vector<1x32xf32>
    %181 = arith.mulf %174, %163 : vector<1x32xf32>
    %182 = arith.mulf %173, %180 : vector<1x32xf32>
    %183 = arith.addf %181, %182 : vector<1x32xf32>
    %184 = math.tanh %183 : vector<1x32xf32>
    %185 = arith.mulf %175, %184 : vector<1x32xf32>
    %cst_40 = arith.constant dense<0.000000e+00> : vector<1x128xf32>
    %186 = tpu.matmul %185, %0, %cst_40 {dimension_numbers = #tpu.dot_dimension_numbers<[1], [0], [0], [1], [0, 0, 1, 1], [], []>} : vector<1x32xf32>, vector<32x128xf32>, vector<1x128xf32> -> vector<1x128xf32>
    %187 = arith.addf %34, %186 : vector<1x128xf32>
    %188 = arith.negf %187 : vector<1x128xf32>
    %189 = math.exp %188 : vector<1x128xf32>
    %cst_41 = arith.constant 1.000000e+00 : f32
    %190 = vector.broadcast %cst_41 : f32 to vector<1x128xf32>
    %191 = arith.addf %190, %189 : vector<1x128xf32>
    %192 = arith.divf %190, %191 : vector<1x128xf32>
    %193 = vector.extract_strided_slice %192 {offsets = [0, 0], sizes = [1, 32], strides = [1, 1]} : vector<1x128xf32> to vector<1x32xf32>
    %194 = vector.extract_strided_slice %192 {offsets = [0, 32], sizes = [1, 32], strides = [1, 1]} : vector<1x128xf32> to vector<1x32xf32>
    %195 = vector.extract_strided_slice %192 {offsets = [0, 64], sizes = [1, 32], strides = [1, 1]} : vector<1x128xf32> to vector<1x32xf32>
    %196 = vector.extract_strided_slice %192 {offsets = [0, 96], sizes = [1, 32], strides = [1, 1]} : vector<1x128xf32> to vector<1x32xf32>
    %cst_42 = arith.constant 2.000000e+00 : f32
    %197 = vector.broadcast %cst_42 : f32 to vector<1x32xf32>
    %198 = arith.mulf %197, %196 : vector<1x32xf32>
    %cst_43 = arith.constant 1.000000e+00 : f32
    %199 = vector.broadcast %cst_43 : f32 to vector<1x32xf32>
    %200 = arith.subf %198, %199 : vector<1x32xf32>
    %201 = arith.mulf %194, %183 : vector<1x32xf32>
    %202 = arith.mulf %193, %200 : vector<1x32xf32>
    %203 = arith.addf %201, %202 : vector<1x32xf32>
    %204 = math.tanh %203 : vector<1x32xf32>
    %205 = arith.mulf %195, %204 : vector<1x32xf32>
    %206 = tpu.concatenate %205, %50 in 1 : vector<1x32xf32>, vector<1x32xf32> -> vector<1x64xf32>
    %cst_44 = arith.constant dense<0.000000e+00> : vector<1x32xf32>
    %207 = tpu.matmul %206, %1, %cst_44 {dimension_numbers = #tpu.dot_dimension_numbers<[1], [0], [0], [1], [0, 0, 1, 1], [], []>} : vector<1x64xf32>, vector<64x32xf32>, vector<1x32xf32> -> vector<1x32xf32>
    %208 = arith.addf %207, %2 : vector<1x32xf32>
    %c0_45 = arith.constant 0 : index
    %c0_46 = arith.constant 0 : index
    %209 = vector.load %arg2[%c0_45, %c0_46] : memref<1x32xf32, #tpu.memory_space<vmem>>, vector<1x32xf32>
    tpu.vector_store %arg2[%c0_45, %c0_46], %208 {strides = array<i32>} : memref<1x32xf32, #tpu.memory_space<vmem>>, vector<1x32xf32>,
    return
  }
}

</mosaic_0001>

<llo_original>
// kernel: tpu_custom_call.1
$region0: #{tpu_custom_call.1}
  #allocation0 [shape = 'u32[]', space=smem, size = 0x4, offset = 0x4, fixed_abs, tag = 'smem constant byte address 0x4 - core index']
  #allocation1 [shape = 'u32[144,128]{1,0:T(1,128)}', space=vmem, size = 0x12000, scoped, tag = 'internal scratch']
  %s0 = inlined_call_operand.hbm [shape: s32[8], index: 0, kind: input, shape index: {}]
  %s1 = inlined_call_operand.hbm [shape: f32[129,256], index: 1, kind: input, shape index: {}]
  %s2 = inlined_call_operand.hbm [shape: f32[1,32], index: 2, kind: output, shape index: {}]
  %s3 = sld [smem:[#allocation0]]
  $region26: #{tpu_custom_call.1} parent=0
    _
  %s5 = ssub.s32 1, %s3
  %s6 = scalar_select 0, %s5, %s3
  $region1: #{tpu_custom_call.1} parent=0
    #allocation2 [shape = 'u8[512]{0}', space=smem, size = 0x200, scoped, tag = 'input window, operand 0, single buffered']
    #allocation3 [shape = 's32[1]{0}', space=sflag, size = 0x4, scoped, tag = 'scoped memory for tpu_custom_call.1']
    #allocation4 [shape = 's32[1]{0}', space=sflag, size = 0x4, scoped, tag = 'scoped memory for tpu_custom_call.1']
    #allocation5 [shape = 's32[1]{0}', space=sflag, size = 0x4, scoped, tag = 'scoped memory for tpu_custom_call.1']
    #allocation6 [shape = 'u8[139264]{0}', space=vmem, size = 0x22000, scoped, tag = 'input window, operand 1, single buffered']
    #allocation7 [shape = 'u8[512]{0}', space=vmem, size = 0x400, scoped, tag = 'output window, operand 0, single buffered']
    %7 = vsyncpa [#allocation5], 0
    %8 = vsyncpa [#allocation3], 0
    %9 = vsyncpa [#allocation4], 0
    // Predicated region
    $region2: #{tpu_custom_call.1} parent=1 // pred_check
      _
    $region3: #{tpu_custom_call.1} parent=1 // pred_check_branch
      %11 = sbr.rel (0) target = $region5
    $region4: #{tpu_custom_call.1} parent=1 // pred_region
      %s13 = ssub.s32 16, 16
      %14 = vsyncadd [#allocation5], %s13
      %17 = dma.hbm_to_smem %s0, 16, [#allocation2], [#allocation5]
    $region5: #{tpu_custom_call.1} parent=1 // pred_fallthru
      _
    // Predicated region
    $region6: #{tpu_custom_call.1} parent=1 // pred_check
      _
    $region7: #{tpu_custom_call.1} parent=1 // pred_check_branch
      %19 = sbr.rel (0) target = $region9
    $region8: #{tpu_custom_call.1} parent=1 // pred_region
      %s21 = ssub.s32 4352, 4352
      %22 = vsyncadd [#allocation3], %s21
      %s23 = sshll.u32 [#allocation6], 4
      %s24 = int_to_ptr.vmem [resolvable:$true] %s23
      %29 = dma.hbm_to_vmem [thread:$0]  %s1, 4352, %s24, [#allocation3], 256, 256, 16
    $region9: #{tpu_custom_call.1} parent=1 // pred_fallthru
      _
    // Predicated region
    $region10: #{tpu_custom_call.1} parent=1 // pred_check
      _
    $region11: #{tpu_custom_call.1} parent=1 // pred_check_branch
      %31 = sbr.rel (0) target = $region13
    $region12: #{tpu_custom_call.1} parent=1 // pred_region
      %32 = dma.done [#allocation5], 16
    $region13: #{tpu_custom_call.1} parent=1 // pred_fallthru
      _
    // Predicated region
    $region14: #{tpu_custom_call.1} parent=1 // pred_check
      _
    $region15: #{tpu_custom_call.1} parent=1 // pred_check_branch
      %34 = sbr.rel (0) target = $region17
    $region16: #{tpu_custom_call.1} parent=1 // pred_region
      %35 = dma.done [#allocation3], 4352
    $region17: #{tpu_custom_call.1} parent=1 // pred_fallthru
      _
    %36 = sfence
    %v37 = vld [vmem:[#allocation6 + $0x40] sm:$0xff]
    %v38 = vld [vmem:[#allocation6 + $0x50] sm:$0xff]
    %v39 = vld [vmem:[#allocation6 + $0x60] sm:$0xff]
    %v40 = vld [vmem:[#allocation6 + $0x70] sm:$0xff]
    %v41 = vld [vmem:[#allocation6 + $0x80] sm:$0xff]
    %v42 = vld [vmem:[#allocation6 + $0x90] sm:$0xff]
    %v43 = vld [vmem:[#allocation6 + $0xa0] sm:$0xff]
    %v44 = vld [vmem:[#allocation6 + $0xb0] sm:$0xff]
    %v45 = vld [vmem:[#allocation6 + $0xc0] sm:$0xff]
    %v46 = vld [vmem:[#allocation6 + $0xd0] sm:$0xff]
    %v47 = vld [vmem:[#allocation6 + $0xe0] sm:$0xff]
    %v48 = vld [vmem:[#allocation6 + $0xf0] sm:$0xff]
    %v49 = vld [vmem:[#allocation6 + $0x100] ss:$0 sm:$0xff]
    %s50 = sld [smem:[#allocation2]]
    %s51 = sshra.s32 %s50, 3
    %s52 = sand.u32 %s50, 7
    %s53 = sshra.s32 %s50, 3
    %s54 = sand.u32 %s50, 7
    %s55 = smul.u32 %s51, 2
    %s56 = smul.u32 %s55, 8
    %s57 = sadd.s32 %s56, %s54
    %s58 = scalar_lea.vmem [#allocation6], %s57
    %v59 = vld [vmem:[%s58] ss:$8 sm:$0x3]
    %s60 = sld [smem:[#allocation2 + $0x1]]
    %s61 = sshra.s32 %s60, 3
    %s62 = sand.u32 %s60, 7
    %s63 = sshra.s32 %s60, 3
    %s64 = sand.u32 %s60, 7
    %s65 = smul.u32 %s61, 2
    %s66 = smul.u32 %s65, 8
    %s67 = sadd.s32 %s66, %s64
    %s68 = scalar_lea.vmem [#allocation6], %s67
    %v69 = vld [vmem:[%s68] ss:$8 sm:$0x3]
    %s70 = sld [smem:[#allocation2 + $0x2]]
    %s71 = sshra.s32 %s70, 3
    %s72 = sand.u32 %s70, 7
    %s73 = sshra.s32 %s70, 3
    %s74 = sand.u32 %s70, 7
    %s75 = smul.u32 %s71, 2
    %s76 = smul.u32 %s75, 8
    %s77 = sadd.s32 %s76, %s74
    %s78 = scalar_lea.vmem [#allocation6], %s77
    %v79 = vld [vmem:[%s78] ss:$8 sm:$0x3]
    %s80 = sld [smem:[#allocation2 + $0x3]]
    %s81 = sshra.s32 %s80, 3
    %s82 = sand.u32 %s80, 7
    %s83 = sshra.s32 %s80, 3
    %s84 = sand.u32 %s80, 7
    %s85 = smul.u32 %s81, 2
    %s86 = smul.u32 %s85, 8
    %s87 = sadd.s32 %s86, %s84
    %s88 = scalar_lea.vmem [#allocation6], %s87
    %v89 = vld [vmem:[%s88] ss:$8 sm:$0x3]
    %s90 = sld [smem:[#allocation2 + $0x4]]
    %s91 = sshra.s32 %s90, 3
    %s92 = sand.u32 %s90, 7
    %s93 = sshra.s32 %s90, 3
    %s94 = sand.u32 %s90, 7
    %s95 = smul.u32 %s91, 2
    %s96 = smul.u32 %s95, 8
    %s97 = sadd.s32 %s96, %s94
    %s98 = scalar_lea.vmem [#allocation6], %s97
    %v99 = vld [vmem:[%s98] ss:$8 sm:$0x3]
    %s100 = sld [smem:[#allocation2 + $0x5]]
    %s101 = sshra.s32 %s100, 3
    %s102 = sand.u32 %s100, 7
    %s103 = sshra.s32 %s100, 3
    %s104 = sand.u32 %s100, 7
    %s105 = smul.u32 %s101, 2
    %s106 = smul.u32 %s105, 8
    %s107 = sadd.s32 %s106, %s104
    %s108 = scalar_lea.vmem [#allocation6], %s107
    %v109 = vld [vmem:[%s108] ss:$8 sm:$0x3]
    %s110 = sld [smem:[#allocation2 + $0x6]]
    %s111 = sshra.s32 %s110, 3
    %s112 = sand.u32 %s110, 7
    %s113 = sshra.s32 %s110, 3
    %s114 = sand.u32 %s110, 7
    %s115 = smul.u32 %s111, 2
    %s116 = smul.u32 %s115, 8
    %s117 = sadd.s32 %s116, %s114
    %s118 = scalar_lea.vmem [#allocation6], %s117
    %v119 = vld [vmem:[%s118] ss:$8 sm:$0x3]
    %s120 = sld [smem:[#allocation2 + $0x7]]
    %s121 = sshra.s32 %s120, 3
    %s122 = sand.u32 %s120, 7
    %s123 = sshra.s32 %s120, 3
    %s124 = sand.u32 %s120, 7
    %s125 = smul.u32 %s121, 2
    %s126 = smul.u32 %s125, 8
    %s127 = sadd.s32 %s126, %s124
    %s128 = scalar_lea.vmem [#allocation6], %s127
    %v129 = vld [vmem:[%s128] ss:$8 sm:$0x3]
    %v131 = vrot.slane %v129, 1
    %v133 = vxor.u32 %v131, 2147483648
    %v134 = vmul.f32 %v133, 1.442695
    %v135 = vpow.pop %v134
    %v136 = vadd.f32 %v135, 1.0
    %v137 = vrcp.pop %v136
    %v138 = vmul.f32 1.0, %v137
    %v139 = vmul.f32 %v138, 2.0
    %v140 = vsub.f32 %v139, 1.0
    %142 = vrot.lane.b32.xlu0 %v140, 32
    %v143 = vpop.permute.xlu0 %142
    %v145 = vmul.f32 %v138, %v143
    %v146 = vtanh.pop %v145
    %148 = vrot.lane.b32.xlu0 %v146, 64
    %v149 = vpop.permute.xlu0 %148
    %v151 = vmul.f32 %v138, %v149
    %v152 = vxor.u32 %v59, 2147483648
    %v153 = vmul.f32 %v152, 1.442695
    %v154 = vpow.pop %v153
    %v155 = vadd.f32 %v154, 1.0
    %v156 = vrcp.pop %v155
    %v157 = vmul.f32 1.0, %v156
    %v158 = vmul.f32 %v157, 2.0
    %v159 = vsub.f32 %v158, 1.0
    %161 = vrot.lane.b32.xlu0 %v159, 32
    %v162 = vpop.permute.xlu0 %161
    %v164 = vmul.f32 %v157, %v162
    %v165 = vtanh.pop %v164
    %167 = vrot.lane.b32.xlu0 %v165, 64
    %v168 = vpop.permute.xlu0 %167
    %v170 = vmul.f32 %v157, %v168
    %v172 = vlaneseq
    %v173 = vshrl.u32 %v172, 7
    %v174 = vsub.s32 0, %v173
    %v175 = vrot.slane %v170, %v174
    %176 = vrot.lane.b32.xlu0 %v175, 64
    %v177 = vpop.permute.xlu0 %176
    %vm178 = vcmask 261120
    %v179 = vsel %vm178, %v177, 0
    %181 = vmatprep.subr.mxu0 0.0
    %182 = vmatpush1.msra.mxu0 0.0
    %183 = vmatprep.subr.mxu0 0.0
    %184 = vmatpush1.msra.mxu0 0.0
    %185 = vmatprep.subr.mxu0 0.0
    %186 = vmatpush1.msra.mxu0 0.0
    %187 = vmatprep.subr.mxu0 0.0
    %188 = vmatpush1.msra.mxu0 0.0
    %189 = vmatprep.subr.mxu0 0.0
    %190 = vmatpush1.msra.mxu0 0.0
    %191 = vmatprep.subr.mxu0 0.0
    %192 = vmatpush1.msra.mxu0 0.0
    %193 = vmatprep.subr.mxu0 0.0
    %194 = vmatpush1.msra.mxu0 0.0
    %195 = vmatprep.subr.mxu0 0.0
    %196 = vmatpush1.msra.mxu0 0.0
    %197 = vmatprep.subr.mxu0 0.0
    %198 = vmatpush1.msra.mxu0 0.0
    %199 = vmatprep.subr.mxu0 0.0
    %200 = vmatpush1.msra.mxu0 0.0
    %201 = vmatprep.subr.mxu0 0.0
    %202 = vmatpush1.msra.mxu0 0.0
    %203 = vmatprep.subr.mxu0 0.0
    %204 = vmatpush1.msra.mxu0 0.0
    %205 = vmatprep.subr.mxu0 0.0
    %206 = vmatpush1.msra.mxu0 %v40
    %207 = vmatprep.subr.mxu0 0.0
    %208 = vmatpush1.msra.mxu0 %v39
    %209 = vmatprep.subr.mxu0 0.0
    %210 = vmatpush1.msra.mxu0 %v38
    %211 = vmatprep.subr.mxu0 0.0
    %212 = vmatpush1.msra.mxu0 %v37
    %213 = vmatprep.subr.mxu0 0.0
    %214 = vmatpush2.msra.mxu0 0.0
    %215 = vmatprep.subr.mxu0 0.0
    %216 = vmatpush2.msra.mxu0 0.0
    %217 = vmatprep.subr.mxu0 0.0
    %218 = vmatpush2.msra.mxu0 0.0
    %219 = vmatprep.subr.mxu0 0.0
    %220 = vmatpush2.msra.mxu0 0.0
    %221 = vmatprep.subr.mxu0 0.0
    %222 = vmatpush2.msra.mxu0 0.0
    %223 = vmatprep.subr.mxu0 0.0
    %224 = vmatpush2.msra.mxu0 0.0
    %225 = vmatprep.subr.mxu0 0.0
    %226 = vmatpush2.msra.mxu0 0.0
    %227 = vmatprep.subr.mxu0 0.0
    %228 = vmatpush2.msra.mxu0 0.0
    %229 = vmatprep.subr.mxu0 0.0
    %230 = vmatpush2.msra.mxu0 0.0
    %231 = vmatprep.subr.mxu0 0.0
    %232 = vmatpush2.msra.mxu0 0.0
    %233 = vmatprep.subr.mxu0 0.0
    %234 = vmatpush2.msra.mxu0 0.0
    %235 = vmatprep.subr.mxu0 0.0
    %236 = vmatpush2.msra.mxu0 0.0
    %237 = vmatprep.subr.mxu0 0.0
    %238 = vmatpush2.msra.mxu0 0.0
    %239 = vmatprep.subr.mxu0 0.0
    %240 = vmatpush2.msra.mxu0 0.0
    %241 = vmatprep.subr.mxu0 0.0
    %242 = vmatpush2.msra.mxu0 0.0
    %243 = vmatprep.subr.mxu0 0.0
    %244 = vmatpush2.msra.mxu0 0.0
    %245 = vmatprep.mubr.f32.mxu0 0.0
    %246 = vmatmul.mubr.f32.gmra.mxu0 %v179
    %v247 = vpop.f32.mrf.mxu0
    %v248 = vadd.f32 0.0, %v247
    %v249 = vpop.f32.mrf.mxu0
    %250 = vdwg.mxu0
    %v251 = vadd.f32 %v69, %v248
    %v252 = vxor.u32 %v251, 2147483648
    %v253 = vmul.f32 %v252, 1.442695
    %v254 = vpow.pop %v253
    %v255 = vadd.f32 %v254, 1.0
    %v256 = vrcp.pop %v255
    %v257 = vmul.f32 1.0, %v256
    %v258 = vmul.f32 %v257, 2.0
    %v259 = vsub.f32 %v258, 1.0
    %261 = vrot.lane.b32.xlu0 %v164, 32
    %v262 = vpop.permute.xlu0 %261
    %v264 = vmul.f32 %v257, %v262
    %266 = vrot.lane.b32.xlu0 %v259, 32
    %v267 = vpop.permute.xlu0 %266
    %v269 = vmul.f32 %v257, %v267
    %271 = vrot.lane.b32.xlu0 %v269, 32
    %v272 = vpop.permute.xlu0 %271
    %v274 = vadd.f32 %v264, %v272
    %v275 = vtanh.pop %v274
    %277 = vrot.lane.b32.xlu0 %v275, 32
    %v278 = vpop.permute.xlu0 %277
    %v280 = vmul.f32 %v257, %v278
    %v282 = vlaneseq
    %v283 = vshrl.u32 %v282, 7
    %v284 = vsub.s32 0, %v283
    %v285 = vrot.slane %v280, %v284
    %286 = vrot.lane.b32.xlu0 %v285, 64
    %v287 = vpop.permute.xlu0 %286
    %v288 = vsel %vm178, %v287, 0
    %290 = vmatprep.subr.mxu0 0.0
    %291 = vmatpush1.msra.mxu0 0.0
    %292 = vmatprep.subr.mxu0 0.0
    %293 = vmatpush1.msra.mxu0 0.0
    %294 = vmatprep.subr.mxu0 0.0
    %295 = vmatpush1.msra.mxu0 0.0
    %296 = vmatprep.subr.mxu0 0.0
    %297 = vmatpush1.msra.mxu0 0.0
    %298 = vmatprep.subr.mxu0 0.0
    %299 = vmatpush1.msra.mxu0 0.0
    %300 = vmatprep.subr.mxu0 0.0
    %301 = vmatpush1.msra.mxu0 0.0
    %302 = vmatprep.subr.mxu0 0.0
    %303 = vmatpush1.msra.mxu0 0.0
    %304 = vmatprep.subr.mxu0 0.0
    %305 = vmatpush1.msra.mxu0 0.0
    %306 = vmatprep.subr.mxu0 0.0
    %307 = vmatpush1.msra.mxu0 0.0
    %308 = vmatprep.subr.mxu0 0.0
    %309 = vmatpush1.msra.mxu0 0.0
    %310 = vmatprep.subr.mxu0 0.0
    %311 = vmatpush1.msra.mxu0 0.0
    %312 = vmatprep.subr.mxu0 0.0
    %313 = vmatpush1.msra.mxu0 0.0
    %314 = vmatprep.subr.mxu0 0.0
    %315 = vmatpush1.msra.mxu0 %v40
    %316 = vmatprep.subr.mxu0 0.0
    %317 = vmatpush1.msra.mxu0 %v39
    %318 = vmatprep.subr.mxu0 0.0
    %319 = vmatpush1.msra.mxu0 %v38
    %320 = vmatprep.subr.mxu0 0.0
    %321 = vmatpush1.msra.mxu0 %v37
    %322 = vmatprep.subr.mxu0 0.0
    %323 = vmatpush2.msra.mxu0 0.0
    %324 = vmatprep.subr.mxu0 0.0
    %325 = vmatpush2.msra.mxu0 0.0
    %326 = vmatprep.subr.mxu0 0.0
    %327 = vmatpush2.msra.mxu0 0.0
    %328 = vmatprep.subr.mxu0 0.0
    %329 = vmatpush2.msra.mxu0 0.0
    %330 = vmatprep.subr.mxu0 0.0
    %331 = vmatpush2.msra.mxu0 0.0
    %332 = vmatprep.subr.mxu0 0.0
    %333 = vmatpush2.msra.mxu0 0.0
    %334 = vmatprep.subr.mxu0 0.0
    %335 = vmatpush2.msra.mxu0 0.0
    %336 = vmatprep.subr.mxu0 0.0
    %337 = vmatpush2.msra.mxu0 0.0
    %338 = vmatprep.subr.mxu0 0.0
    %339 = vmatpush2.msra.mxu0 0.0
    %340 = vmatprep.subr.mxu0 0.0
    %341 = vmatpush2.msra.mxu0 0.0
    %342 = vmatprep.subr.mxu0 0.0
    %343 = vmatpush2.msra.mxu0 0.0
    %344 = vmatprep.subr.mxu0 0.0
    %345 = vmatpush2.msra.mxu0 0.0
    %346 = vmatprep.subr.mxu0 0.0
    %347 = vmatpush2.msra.mxu0 0.0
    %348 = vmatprep.subr.mxu0 0.0
    %349 = vmatpush2.msra.mxu0 0.0
    %350 = vmatprep.subr.mxu0 0.0
    %351 = vmatpush2.msra.mxu0 0.0
    %352 = vmatprep.subr.mxu0 0.0
    %353 = vmatpush2.msra.mxu0 0.0
    %354 = vmatprep.mubr.f32.mxu0 0.0
    %355 = vmatmul.mubr.f32.gmra.mxu0 %v288
    %v356 = vpop.f32.mrf.mxu0
    %v357 = vadd.f32 0.0, %v356
    %v358 = vpop.f32.mrf.mxu0
    %359 = vdwg.mxu0
    %v360 = vadd.f32 %v79, %v357
    %v361 = vxor.u32 %v360, 2147483648
    %v362 = vmul.f32 %v361, 1.442695
    %v363 = vpow.pop %v362
    %v364 = vadd.f32 %v363, 1.0
    %v365 = vrcp.pop %v364
    %v366 = vmul.f32 1.0, %v365
    %v367 = vmul.f32 %v366, 2.0
    %v368 = vsub.f32 %v367, 1.0
    %v369 = vmul.f32 %v366, %v274
    %371 = vrot.lane.b32.xlu0 %v368, 32
    %v372 = vpop.permute.xlu0 %371
    %v374 = vmul.f32 %v366, %v372
    %376 = vrot.lane.b32.xlu0 %v374, 32
    %v377 = vpop.permute.xlu0 %376
    %v379 = vadd.f32 %v369, %v377
    %v380 = vtanh.pop %v379
    %382 = vrot.lane.b32.xlu0 %v380, 32
    %v383 = vpop.permute.xlu0 %382
    %v385 = vmul.f32 %v366, %v383
    %v387 = vlaneseq
    %v388 = vshrl.u32 %v387, 7
    %v389 = vsub.s32 0, %v388
    %v390 = vrot.slane %v385, %v389
    %391 = vrot.lane.b32.xlu0 %v390, 64
    %v392 = vpop.permute.xlu0 %391
    %v393 = vsel %vm178, %v392, 0
    %395 = vmatprep.subr.mxu0 0.0
    %396 = vmatpush1.msra.mxu0 0.0
    %397 = vmatprep.subr.mxu0 0.0
    %398 = vmatpush1.msra.mxu0 0.0
    %399 = vmatprep.subr.mxu0 0.0
    %400 = vmatpush1.msra.mxu0 0.0
    %401 = vmatprep.subr.mxu0 0.0
    %402 = vmatpush1.msra.mxu0 0.0
    %403 = vmatprep.subr.mxu0 0.0
    %404 = vmatpush1.msra.mxu0 0.0
    %405 = vmatprep.subr.mxu0 0.0
    %406 = vmatpush1.msra.mxu0 0.0
    %407 = vmatprep.subr.mxu0 0.0
    %408 = vmatpush1.msra.mxu0 0.0
    %409 = vmatprep.subr.mxu0 0.0
    %410 = vmatpush1.msra.mxu0 0.0
    %411 = vmatprep.subr.mxu0 0.0
    %412 = vmatpush1.msra.mxu0 0.0
    %413 = vmatprep.subr.mxu0 0.0
    %414 = vmatpush1.msra.mxu0 0.0
    %415 = vmatprep.subr.mxu0 0.0
    %416 = vmatpush1.msra.mxu0 0.0
    %417 = vmatprep.subr.mxu0 0.0
    %418 = vmatpush1.msra.mxu0 0.0
    %419 = vmatprep.subr.mxu0 0.0
    %420 = vmatpush1.msra.mxu0 %v40
    %421 = vmatprep.subr.mxu0 0.0
    %422 = vmatpush1.msra.mxu0 %v39
    %423 = vmatprep.subr.mxu0 0.0
    %424 = vmatpush1.msra.mxu0 %v38
    %425 = vmatprep.subr.mxu0 0.0
    %426 = vmatpush1.msra.mxu0 %v37
    %427 = vmatprep.subr.mxu0 0.0
    %428 = vmatpush2.msra.mxu0 0.0
    %429 = vmatprep.subr.mxu0 0.0
    %430 = vmatpush2.msra.mxu0 0.0
    %431 = vmatprep.subr.mxu0 0.0
    %432 = vmatpush2.msra.mxu0 0.0
    %433 = vmatprep.subr.mxu0 0.0
    %434 = vmatpush2.msra.mxu0 0.0
    %435 = vmatprep.subr.mxu0 0.0
    %436 = vmatpush2.msra.mxu0 0.0
    %437 = vmatprep.subr.mxu0 0.0
    %438 = vmatpush2.msra.mxu0 0.0
    %439 = vmatprep.subr.mxu0 0.0
    %440 = vmatpush2.msra.mxu0 0.0
    %441 = vmatprep.subr.mxu0 0.0
    %442 = vmatpush2.msra.mxu0 0.0
    %443 = vmatprep.subr.mxu0 0.0
    %444 = vmatpush2.msra.mxu0 0.0
    %445 = vmatprep.subr.mxu0 0.0
    %446 = vmatpush2.msra.mxu0 0.0
    %447 = vmatprep.subr.mxu0 0.0
    %448 = vmatpush2.msra.mxu0 0.0
    %449 = vmatprep.subr.mxu0 0.0
    %450 = vmatpush2.msra.mxu0 0.0
    %451 = vmatprep.subr.mxu0 0.0
    %452 = vmatpush2.msra.mxu0 0.0
    %453 = vmatprep.subr.mxu0 0.0
    %454 = vmatpush2.msra.mxu0 0.0
    %455 = vmatprep.subr.mxu0 0.0
    %456 = vmatpush2.msra.mxu0 0.0
    %457 = vmatprep.subr.mxu0 0.0
    %458 = vmatpush2.msra.mxu0 0.0
    %459 = vmatprep.mubr.f32.mxu0 0.0
    %460 = vmatmul.mubr.f32.gmra.mxu0 %v393
    %v461 = vpop.f32.mrf.mxu0
    %v462 = vadd.f32 0.0, %v461
    %v463 = vpop.f32.mrf.mxu0
    %464 = vdwg.mxu0
    %v465 = vadd.f32 %v89, %v462
    %v466 = vxor.u32 %v465, 2147483648
    %v467 = vmul.f32 %v466, 1.442695
    %v468 = vpow.pop %v467
    %v469 = vadd.f32 %v468, 1.0
    %v470 = vrcp.pop %v469
    %v471 = vmul.f32 1.0, %v470
    %v472 = vmul.f32 %v471, 2.0
    %v473 = vsub.f32 %v472, 1.0
    %v474 = vmul.f32 %v471, %v379
    %476 = vrot.lane.b32.xlu0 %v473, 32
    %v477 = vpop.permute.xlu0 %476
    %v479 = vmul.f32 %v471, %v477
    %481 = vrot.lane.b32.xlu0 %v479, 32
    %v482 = vpop.permute.xlu0 %481
    %v484 = vadd.f32 %v474, %v482
    %v485 = vtanh.pop %v484
    %487 = vrot.lane.b32.xlu0 %v485, 32
    %v488 = vpop.permute.xlu0 %487
    %v490 = vmul.f32 %v471, %v488
    %v492 = vlaneseq
    %v493 = vshrl.u32 %v492, 7
    %v494 = vsub.s32 0, %v493
    %v495 = vrot.slane %v490, %v494
    %496 = vrot.lane.b32.xlu0 %v495, 64
    %v497 = vpop.permute.xlu0 %496
    %v498 = vsel %vm178, %v497, 0
    %500 = vmatprep.subr.mxu0 0.0
    %501 = vmatpush1.msra.mxu0 0.0
    %502 = vmatprep.subr.mxu0 0.0
    %503 = vmatpush1.msra.mxu0 0.0
    %504 = vmatprep.subr.mxu0 0.0
    %505 = vmatpush1.msra.mxu0 0.0
    %506 = vmatprep.subr.mxu0 0.0
    %507 = vmatpush1.msra.mxu0 0.0
    %508 = vmatprep.subr.mxu0 0.0
    %509 = vmatpush1.msra.mxu0 0.0
    %510 = vmatprep.subr.mxu0 0.0
    %511 = vmatpush1.msra.mxu0 0.0
    %512 = vmatprep.subr.mxu0 0.0
    %513 = vmatpush1.msra.mxu0 0.0
    %514 = vmatprep.subr.mxu0 0.0
    %515 = vmatpush1.msra.mxu0 0.0
    %516 = vmatprep.subr.mxu0 0.0
    %517 = vmatpush1.msra.mxu0 0.0
    %518 = vmatprep.subr.mxu0 0.0
    %519 = vmatpush1.msra.mxu0 0.0
    %520 = vmatprep.subr.mxu0 0.0
    %521 = vmatpush1.msra.mxu0 0.0
    %522 = vmatprep.subr.mxu0 0.0
    %523 = vmatpush1.msra.mxu0 0.0
    %524 = vmatprep.subr.mxu0 0.0
    %525 = vmatpush1.msra.mxu0 %v40
    %526 = vmatprep.subr.mxu0 0.0
    %527 = vmatpush1.msra.mxu0 %v39
    %528 = vmatprep.subr.mxu0 0.0
    %529 = vmatpush1.msra.mxu0 %v38
    %530 = vmatprep.subr.mxu0 0.0
    %531 = vmatpush1.msra.mxu0 %v37
    %532 = vmatprep.subr.mxu0 0.0
    %533 = vmatpush2.msra.mxu0 0.0
    %534 = vmatprep.subr.mxu0 0.0
    %535 = vmatpush2.msra.mxu0 0.0
    %536 = vmatprep.subr.mxu0 0.0
    %537 = vmatpush2.msra.mxu0 0.0
    %538 = vmatprep.subr.mxu0 0.0
    %539 = vmatpush2.msra.mxu0 0.0
    %540 = vmatprep.subr.mxu0 0.0
    %541 = vmatpush2.msra.mxu0 0.0
    %542 = vmatprep.subr.mxu0 0.0
    %543 = vmatpush2.msra.mxu0 0.0
    %544 = vmatprep.subr.mxu0 0.0
    %545 = vmatpush2.msra.mxu0 0.0
    %546 = vmatprep.subr.mxu0 0.0
    %547 = vmatpush2.msra.mxu0 0.0
    %548 = vmatprep.subr.mxu0 0.0
    %549 = vmatpush2.msra.mxu0 0.0
    %550 = vmatprep.subr.mxu0 0.0
    %551 = vmatpush2.msra.mxu0 0.0
    %552 = vmatprep.subr.mxu0 0.0
    %553 = vmatpush2.msra.mxu0 0.0
    %554 = vmatprep.subr.mxu0 0.0
    %555 = vmatpush2.msra.mxu0 0.0
    %556 = vmatprep.subr.mxu0 0.0
    %557 = vmatpush2.msra.mxu0 0.0
    %558 = vmatprep.subr.mxu0 0.0
    %559 = vmatpush2.msra.mxu0 0.0
    %560 = vmatprep.subr.mxu0 0.0
    %561 = vmatpush2.msra.mxu0 0.0
    %562 = vmatprep.subr.mxu0 0.0
    %563 = vmatpush2.msra.mxu0 0.0
    %564 = vmatprep.mubr.f32.mxu0 0.0
    %565 = vmatmul.mubr.f32.gmra.mxu0 %v498
    %v566 = vpop.f32.mrf.mxu0
    %v567 = vadd.f32 0.0, %v566
    %v568 = vpop.f32.mrf.mxu0
    %569 = vdwg.mxu0
    %v570 = vadd.f32 %v99, %v567
    %v571 = vxor.u32 %v570, 2147483648
    %v572 = vmul.f32 %v571, 1.442695
    %v573 = vpow.pop %v572
    %v574 = vadd.f32 %v573, 1.0
    %v575 = vrcp.pop %v574
    %v576 = vmul.f32 1.0, %v575
    %v577 = vmul.f32 %v576, 2.0
    %v578 = vsub.f32 %v577, 1.0
    %v579 = vmul.f32 %v576, %v484
    %581 = vrot.lane.b32.xlu0 %v578, 32
    %v582 = vpop.permute.xlu0 %581
    %v584 = vmul.f32 %v576, %v582
    %586 = vrot.lane.b32.xlu0 %v584, 32
    %v587 = vpop.permute.xlu0 %586
    %v589 = vadd.f32 %v579, %v587
    %v590 = vtanh.pop %v589
    %592 = vrot.lane.b32.xlu0 %v590, 32
    %v593 = vpop.permute.xlu0 %592
    %v595 = vmul.f32 %v576, %v593
    %v597 = vlaneseq
    %v598 = vshrl.u32 %v597, 7
    %v599 = vsub.s32 0, %v598
    %v600 = vrot.slane %v595, %v599
    %601 = vrot.lane.b32.xlu0 %v600, 64
    %v602 = vpop.permute.xlu0 %601
    %v603 = vsel %vm178, %v602, 0
    %605 = vmatprep.subr.mxu0 0.0
    %606 = vmatpush1.msra.mxu0 0.0
    %607 = vmatprep.subr.mxu0 0.0
    %608 = vmatpush1.msra.mxu0 0.0
    %609 = vmatprep.subr.mxu0 0.0
    %610 = vmatpush1.msra.mxu0 0.0
    %611 = vmatprep.subr.mxu0 0.0
    %612 = vmatpush1.msra.mxu0 0.0
    %613 = vmatprep.subr.mxu0 0.0
    %614 = vmatpush1.msra.mxu0 0.0
    %615 = vmatprep.subr.mxu0 0.0
    %616 = vmatpush1.msra.mxu0 0.0
    %617 = vmatprep.subr.mxu0 0.0
    %618 = vmatpush1.msra.mxu0 0.0
    %619 = vmatprep.subr.mxu0 0.0
    %620 = vmatpush1.msra.mxu0 0.0
    %621 = vmatprep.subr.mxu0 0.0
    %622 = vmatpush1.msra.mxu0 0.0
    %623 = vmatprep.subr.mxu0 0.0
    %624 = vmatpush1.msra.mxu0 0.0
    %625 = vmatprep.subr.mxu0 0.0
    %626 = vmatpush1.msra.mxu0 0.0
    %627 = vmatprep.subr.mxu0 0.0
    %628 = vmatpush1.msra.mxu0 0.0
    %629 = vmatprep.subr.mxu0 0.0
    %630 = vmatpush1.msra.mxu0 %v40
    %631 = vmatprep.subr.mxu0 0.0
    %632 = vmatpush1.msra.mxu0 %v39
    %633 = vmatprep.subr.mxu0 0.0
    %634 = vmatpush1.msra.mxu0 %v38
    %635 = vmatprep.subr.mxu0 0.0
    %636 = vmatpush1.msra.mxu0 %v37
    %637 = vmatprep.subr.mxu0 0.0
    %638 = vmatpush2.msra.mxu0 0.0
    %639 = vmatprep.subr.mxu0 0.0
    %640 = vmatpush2.msra.mxu0 0.0
    %641 = vmatprep.subr.mxu0 0.0
    %642 = vmatpush2.msra.mxu0 0.0
    %643 = vmatprep.subr.mxu0 0.0
    %644 = vmatpush2.msra.mxu0 0.0
    %645 = vmatprep.subr.mxu0 0.0
    %646 = vmatpush2.msra.mxu0 0.0
    %647 = vmatprep.subr.mxu0 0.0
    %648 = vmatpush2.msra.mxu0 0.0
    %649 = vmatprep.subr.mxu0 0.0
    %650 = vmatpush2.msra.mxu0 0.0
    %651 = vmatprep.subr.mxu0 0.0
    %652 = vmatpush2.msra.mxu0 0.0
    %653 = vmatprep.subr.mxu0 0.0
    %654 = vmatpush2.msra.mxu0 0.0
    %655 = vmatprep.subr.mxu0 0.0
    %656 = vmatpush2.msra.mxu0 0.0
    %657 = vmatprep.subr.mxu0 0.0
    %658 = vmatpush2.msra.mxu0 0.0
    %659 = vmatprep.subr.mxu0 0.0
    %660 = vmatpush2.msra.mxu0 0.0
    %661 = vmatprep.subr.mxu0 0.0
    %662 = vmatpush2.msra.mxu0 0.0
    %663 = vmatprep.subr.mxu0 0.0
    %664 = vmatpush2.msra.mxu0 0.0
    %665 = vmatprep.subr.mxu0 0.0
    %666 = vmatpush2.msra.mxu0 0.0
    %667 = vmatprep.subr.mxu0 0.0
    %668 = vmatpush2.msra.mxu0 0.0
    %669 = vmatprep.mubr.f32.mxu0 0.0
    %670 = vmatmul.mubr.f32.gmra.mxu0 %v603
    %v671 = vpop.f32.mrf.mxu0
    %v672 = vadd.f32 0.0, %v671
    %v673 = vpop.f32.mrf.mxu0
    %674 = vdwg.mxu0
    %v675 = vadd.f32 %v109, %v672
    %v676 = vxor.u32 %v675, 2147483648
    %v677 = vmul.f32 %v676, 1.442695
    %v678 = vpow.pop %v677
    %v679 = vadd.f32 %v678, 1.0
    %v680 = vrcp.pop %v679
    %v681 = vmul.f32 1.0, %v680
    %v682 = vmul.f32 %v681, 2.0
    %v683 = vsub.f32 %v682, 1.0
    %v684 = vmul.f32 %v681, %v589
    %686 = vrot.lane.b32.xlu0 %v683, 32
    %v687 = vpop.permute.xlu0 %686
    %v689 = vmul.f32 %v681, %v687
    %691 = vrot.lane.b32.xlu0 %v689, 32
    %v692 = vpop.permute.xlu0 %691
    %v694 = vadd.f32 %v684, %v692
    %v695 = vtanh.pop %v694
    %697 = vrot.lane.b32.xlu0 %v695, 32
    %v698 = vpop.permute.xlu0 %697
    %v700 = vmul.f32 %v681, %v698
    %v702 = vlaneseq
    %v703 = vshrl.u32 %v702, 7
    %v704 = vsub.s32 0, %v703
    %v705 = vrot.slane %v700, %v704
    %706 = vrot.lane.b32.xlu0 %v705, 64
    %v707 = vpop.permute.xlu0 %706
    %v708 = vsel %vm178, %v707, 0
    %710 = vmatprep.subr.mxu0 0.0
    %711 = vmatpush1.msra.mxu0 0.0
    %712 = vmatprep.subr.mxu0 0.0
    %713 = vmatpush1.msra.mxu0 0.0
    %714 = vmatprep.subr.mxu0 0.0
    %715 = vmatpush1.msra.mxu0 0.0
    %716 = vmatprep.subr.mxu0 0.0
    %717 = vmatpush1.msra.mxu0 0.0
    %718 = vmatprep.subr.mxu0 0.0
    %719 = vmatpush1.msra.mxu0 0.0
    %720 = vmatprep.subr.mxu0 0.0
    %721 = vmatpush1.msra.mxu0 0.0
    %722 = vmatprep.subr.mxu0 0.0
    %723 = vmatpush1.msra.mxu0 0.0
    %724 = vmatprep.subr.mxu0 0.0
    %725 = vmatpush1.msra.mxu0 0.0
    %726 = vmatprep.subr.mxu0 0.0
    %727 = vmatpush1.msra.mxu0 0.0
    %728 = vmatprep.subr.mxu0 0.0
    %729 = vmatpush1.msra.mxu0 0.0
    %730 = vmatprep.subr.mxu0 0.0
    %731 = vmatpush1.msra.mxu0 0.0
    %732 = vmatprep.subr.mxu0 0.0
    %733 = vmatpush1.msra.mxu0 0.0
    %734 = vmatprep.subr.mxu0 0.0
    %735 = vmatpush1.msra.mxu0 %v40
    %736 = vmatprep.subr.mxu0 0.0
    %737 = vmatpush1.msra.mxu0 %v39
    %738 = vmatprep.subr.mxu0 0.0
    %739 = vmatpush1.msra.mxu0 %v38
    %740 = vmatprep.subr.mxu0 0.0
    %741 = vmatpush1.msra.mxu0 %v37
    %742 = vmatprep.subr.mxu0 0.0
    %743 = vmatpush2.msra.mxu0 0.0
    %744 = vmatprep.subr.mxu0 0.0
    %745 = vmatpush2.msra.mxu0 0.0
    %746 = vmatprep.subr.mxu0 0.0
    %747 = vmatpush2.msra.mxu0 0.0
    %748 = vmatprep.subr.mxu0 0.0
    %749 = vmatpush2.msra.mxu0 0.0
    %750 = vmatprep.subr.mxu0 0.0
    %751 = vmatpush2.msra.mxu0 0.0
    %752 = vmatprep.subr.mxu0 0.0
    %753 = vmatpush2.msra.mxu0 0.0
    %754 = vmatprep.subr.mxu0 0.0
    %755 = vmatpush2.msra.mxu0 0.0
    %756 = vmatprep.subr.mxu0 0.0
    %757 = vmatpush2.msra.mxu0 0.0
    %758 = vmatprep.subr.mxu0 0.0
    %759 = vmatpush2.msra.mxu0 0.0
    %760 = vmatprep.subr.mxu0 0.0
    %761 = vmatpush2.msra.mxu0 0.0
    %762 = vmatprep.subr.mxu0 0.0
    %763 = vmatpush2.msra.mxu0 0.0
    %764 = vmatprep.subr.mxu0 0.0
    %765 = vmatpush2.msra.mxu0 0.0
    %766 = vmatprep.subr.mxu0 0.0
    %767 = vmatpush2.msra.mxu0 0.0
    %768 = vmatprep.subr.mxu0 0.0
    %769 = vmatpush2.msra.mxu0 0.0
    %770 = vmatprep.subr.mxu0 0.0
    %771 = vmatpush2.msra.mxu0 0.0
    %772 = vmatprep.subr.mxu0 0.0
    %773 = vmatpush2.msra.mxu0 0.0
    %774 = vmatprep.mubr.f32.mxu0 0.0
    %775 = vmatmul.mubr.f32.gmra.mxu0 %v708
    %v776 = vpop.f32.mrf.mxu0
    %v777 = vadd.f32 0.0, %v776
    %v778 = vpop.f32.mrf.mxu0
    %779 = vdwg.mxu0
    %v780 = vadd.f32 %v119, %v777
    %v781 = vxor.u32 %v780, 2147483648
    %v782 = vmul.f32 %v781, 1.442695
    %v783 = vpow.pop %v782
    %v784 = vadd.f32 %v783, 1.0
    %v785 = vrcp.pop %v784
    %v786 = vmul.f32 1.0, %v785
    %v787 = vmul.f32 %v786, 2.0
    %v788 = vsub.f32 %v787, 1.0
    %v789 = vmul.f32 %v786, %v694
    %791 = vrot.lane.b32.xlu0 %v788, 32
    %v792 = vpop.permute.xlu0 %791
    %v794 = vmul.f32 %v786, %v792
    %796 = vrot.lane.b32.xlu0 %v794, 32
    %v797 = vpop.permute.xlu0 %796
    %v799 = vadd.f32 %v789, %v797
    %v800 = vtanh.pop %v799
    %802 = vrot.lane.b32.xlu0 %v800, 32
    %v803 = vpop.permute.xlu0 %802
    %v805 = vmul.f32 %v786, %v803
    %v807 = vlaneseq
    %v808 = vshrl.u32 %v807, 7
    %v809 = vsub.s32 0, %v808
    %v810 = vrot.slane %v805, %v809
    %811 = vrot.lane.b32.xlu0 %v810, 64
    %v812 = vpop.permute.xlu0 %811
    %v813 = vsel %vm178, %v812, 0
    %815 = vmatprep.subr.mxu0 0.0
    %816 = vmatpush1.msra.mxu0 0.0
    %817 = vmatprep.subr.mxu0 0.0
    %818 = vmatpush1.msra.mxu0 0.0
    %819 = vmatprep.subr.mxu0 0.0
    %820 = vmatpush1.msra.mxu0 0.0
    %821 = vmatprep.subr.mxu0 0.0
    %822 = vmatpush1.msra.mxu0 0.0
    %823 = vmatprep.subr.mxu0 0.0
    %824 = vmatpush1.msra.mxu0 0.0
    %825 = vmatprep.subr.mxu0 0.0
    %826 = vmatpush1.msra.mxu0 0.0
    %827 = vmatprep.subr.mxu0 0.0
    %828 = vmatpush1.msra.mxu0 0.0
    %829 = vmatprep.subr.mxu0 0.0
    %830 = vmatpush1.msra.mxu0 0.0
    %831 = vmatprep.subr.mxu0 0.0
    %832 = vmatpush1.msra.mxu0 0.0
    %833 = vmatprep.subr.mxu0 0.0
    %834 = vmatpush1.msra.mxu0 0.0
    %835 = vmatprep.subr.mxu0 0.0
    %836 = vmatpush1.msra.mxu0 0.0
    %837 = vmatprep.subr.mxu0 0.0
    %838 = vmatpush1.msra.mxu0 0.0
    %839 = vmatprep.subr.mxu0 0.0
    %840 = vmatpush1.msra.mxu0 %v40
    %841 = vmatprep.subr.mxu0 0.0
    %842 = vmatpush1.msra.mxu0 %v39
    %843 = vmatprep.subr.mxu0 0.0
    %844 = vmatpush1.msra.mxu0 %v38
    %845 = vmatprep.subr.mxu0 0.0
    %846 = vmatpush1.msra.mxu0 %v37
    %847 = vmatprep.subr.mxu0 0.0
    %848 = vmatpush2.msra.mxu0 0.0
    %849 = vmatprep.subr.mxu0 0.0
    %850 = vmatpush2.msra.mxu0 0.0
    %851 = vmatprep.subr.mxu0 0.0
    %852 = vmatpush2.msra.mxu0 0.0
    %853 = vmatprep.subr.mxu0 0.0
    %854 = vmatpush2.msra.mxu0 0.0
    %855 = vmatprep.subr.mxu0 0.0
    %856 = vmatpush2.msra.mxu0 0.0
    %857 = vmatprep.subr.mxu0 0.0
    %858 = vmatpush2.msra.mxu0 0.0
    %859 = vmatprep.subr.mxu0 0.0
    %860 = vmatpush2.msra.mxu0 0.0
    %861 = vmatprep.subr.mxu0 0.0
    %862 = vmatpush2.msra.mxu0 0.0
    %863 = vmatprep.subr.mxu0 0.0
    %864 = vmatpush2.msra.mxu0 0.0
    %865 = vmatprep.subr.mxu0 0.0
    %866 = vmatpush2.msra.mxu0 0.0
    %867 = vmatprep.subr.mxu0 0.0
    %868 = vmatpush2.msra.mxu0 0.0
    %869 = vmatprep.subr.mxu0 0.0
    %870 = vmatpush2.msra.mxu0 0.0
    %871 = vmatprep.subr.mxu0 0.0
    %872 = vmatpush2.msra.mxu0 0.0
    %873 = vmatprep.subr.mxu0 0.0
    %874 = vmatpush2.msra.mxu0 0.0
    %875 = vmatprep.subr.mxu0 0.0
    %876 = vmatpush2.msra.mxu0 0.0
    %877 = vmatprep.subr.mxu0 0.0
    %878 = vmatpush2.msra.mxu0 0.0
    %879 = vmatprep.mubr.f32.mxu0 0.0
    %880 = vmatmul.mubr.f32.gmra.mxu0 %v813
    %v881 = vpop.f32.mrf.mxu0
    %v882 = vadd.f32 0.0, %v881
    %v883 = vpop.f32.mrf.mxu0
    %884 = vdwg.mxu0
    %v885 = vadd.f32 %v129, %v882
    %v886 = vxor.u32 %v885, 2147483648
    %v887 = vmul.f32 %v886, 1.442695
    %v888 = vpow.pop %v887
    %v889 = vadd.f32 %v888, 1.0
    %v890 = vrcp.pop %v889
    %v891 = vmul.f32 1.0, %v890
    %v892 = vmul.f32 %v891, 2.0
    %v893 = vsub.f32 %v892, 1.0
    %v894 = vmul.f32 %v891, %v799
    %896 = vrot.lane.b32.xlu0 %v893, 32
    %v897 = vpop.permute.xlu0 %896
    %v899 = vmul.f32 %v891, %v897
    %901 = vrot.lane.b32.xlu0 %v899, 32
    %v902 = vpop.permute.xlu0 %901
    %v904 = vadd.f32 %v894, %v902
    %v905 = vtanh.pop %v904
    %907 = vrot.lane.b32.xlu0 %v905, 32
    %v908 = vpop.permute.xlu0 %907
    %v910 = vmul.f32 %v891, %v908
    %v912 = vlaneseq
    %v913 = vshrl.u32 %v912, 7
    %v914 = vsub.s32 0, %v913
    %v915 = vrot.slane %v910, %v914
    %916 = vrot.lane.b32.xlu0 %v915, 64
    %v917 = vpop.permute.xlu0 %916
    %v920 = vlaneseq
    %v921 = vshrl.u32 %v920, 7
    %v922 = vsub.s32 0, %v921
    %v923 = vrot.slane %v151, %v922
    %924 = vrot.lane.b32.xlu0 %v923, 96
    %v925 = vpop.permute.xlu0 %924
    %v927 = vsel %vm178, %v917, %v925
    %vm928 = vcmask 523264
    %v930 = vsel %vm928, %v927, 0
    %932 = vmatprep.subr.mxu0 0.0
    %933 = vmatpush1.msra.mxu0 0.0
    %934 = vmatprep.subr.mxu0 0.0
    %935 = vmatpush1.msra.mxu0 0.0
    %936 = vmatprep.subr.mxu0 0.0
    %937 = vmatpush1.msra.mxu0 0.0
    %938 = vmatprep.subr.mxu0 0.0
    %939 = vmatpush1.msra.mxu0 0.0
    %940 = vmatprep.subr.mxu0 0.0
    %941 = vmatpush1.msra.mxu0 0.0
    %942 = vmatprep.subr.mxu0 0.0
    %943 = vmatpush1.msra.mxu0 0.0
    %944 = vmatprep.subr.mxu0 0.0
    %945 = vmatpush1.msra.mxu0 0.0
    %946 = vmatprep.subr.mxu0 0.0
    %947 = vmatpush1.msra.mxu0 0.0
    %948 = vmatprep.subr.mxu0 0.0
    %949 = vmatpush1.msra.mxu0 %v48
    %950 = vmatprep.subr.mxu0 0.0
    %951 = vmatpush1.msra.mxu0 %v47
    %952 = vmatprep.subr.mxu0 0.0
    %953 = vmatpush1.msra.mxu0 %v46
    %954 = vmatprep.subr.mxu0 0.0
    %955 = vmatpush1.msra.mxu0 %v45
    %956 = vmatprep.subr.mxu0 0.0
    %957 = vmatpush1.msra.mxu0 %v44
    %958 = vmatprep.subr.mxu0 0.0
    %959 = vmatpush1.msra.mxu0 %v43
    %960 = vmatprep.subr.mxu0 0.0
    %961 = vmatpush1.msra.mxu0 %v42
    %962 = vmatprep.subr.mxu0 0.0
    %963 = vmatpush1.msra.mxu0 %v41
    %964 = vmatprep.subr.mxu0 0.0
    %965 = vmatpush2.msra.mxu0 0.0
    %966 = vmatprep.subr.mxu0 0.0
    %967 = vmatpush2.msra.mxu0 0.0
    %968 = vmatprep.subr.mxu0 0.0
    %969 = vmatpush2.msra.mxu0 0.0
    %970 = vmatprep.subr.mxu0 0.0
    %971 = vmatpush2.msra.mxu0 0.0
    %972 = vmatprep.subr.mxu0 0.0
    %973 = vmatpush2.msra.mxu0 0.0
    %974 = vmatprep.subr.mxu0 0.0
    %975 = vmatpush2.msra.mxu0 0.0
    %976 = vmatprep.subr.mxu0 0.0
    %977 = vmatpush2.msra.mxu0 0.0
    %978 = vmatprep.subr.mxu0 0.0
    %979 = vmatpush2.msra.mxu0 0.0
    %980 = vmatprep.subr.mxu0 0.0
    %981 = vmatpush2.msra.mxu0 0.0
    %982 = vmatprep.subr.mxu0 0.0
    %983 = vmatpush2.msra.mxu0 0.0
    %984 = vmatprep.subr.mxu0 0.0
    %985 = vmatpush2.msra.mxu0 0.0
    %986 = vmatprep.subr.mxu0 0.0
    %987 = vmatpush2.msra.mxu0 0.0
    %988 = vmatprep.subr.mxu0 0.0
    %989 = vmatpush2.msra.mxu0 0.0
    %990 = vmatprep.subr.mxu0 0.0
    %991 = vmatpush2.msra.mxu0 0.0
    %992 = vmatprep.subr.mxu0 0.0
    %993 = vmatpush2.msra.mxu0 0.0
    %994 = vmatprep.subr.mxu0 0.0
    %995 = vmatpush2.msra.mxu0 0.0
    %996 = vmatprep.mubr.f32.mxu0 0.0
    %997 = vmatmul.mubr.f32.gmra.mxu0 %v930
    %v998 = vpop.f32.mrf.mxu0
    %v999 = vadd.f32 %v49, %v998
    %v1000 = vpop.f32.mrf.mxu0
    %1001 = vdwg.mxu0
    %vm1002 = vcmask 253952
    %1003 = vst.msk [vmem:[#allocation7] sm:$0x1] %vm1002, %v999
    // Predicated region
    $region18: #{tpu_custom_call.1} parent=1 // pred_check
      _
    $region19: #{tpu_custom_call.1} parent=1 // pred_check_branch
      %1005 = sbr.rel (0) target = $region21
    $region20: #{tpu_custom_call.1} parent=1 // pred_region
      %s1007 = ssub.s32 16, 16
      %1008 = vsyncadd [#allocation4], %s1007
      %s1010 = sshll.u32 [#allocation7], 4
      %s1011 = int_to_ptr.vmem [resolvable:$true] %s1010
      %1013 = dma.vmem_to_hbm [thread:$0]  %s1011, 16, %s2, [#allocation4]
    $region21: #{tpu_custom_call.1} parent=1 // pred_fallthru
      _
    // Predicated region
    $region22: #{tpu_custom_call.1} parent=1 // pred_check
      _
    $region23: #{tpu_custom_call.1} parent=1 // pred_check_branch
      %1015 = sbr.rel (0) target = $region25
    $region24: #{tpu_custom_call.1} parent=1 // pred_region
      %1016 = dma.done [#allocation4], 16
    $region25: #{tpu_custom_call.1} parent=1 // pred_fallthru
      _
    %1017 = vsyncpa [#allocation3], 1
    %1018 = vsyncpa [#allocation4], 1
    %1019 = vsyncpa [#allocation5], 1

</llo_original>
